<compile_context>
chip_gen: v7x
topology: tpu7x:2x2x1
jax: 0.10.0
libtpu: 0.0.40
codegen_flags: <defaults>
</compile_context>

<pallas_src>
import functools

import jax
import jax.numpy as jnp
from jax import lax
from jax.experimental import pallas as pl
from jax.experimental.pallas import tpu as pltpu

LANE = 128
MIN_ROWS = 32            # non-full blocks stay legal for f32/bf16/int8 tiles
MAX_BLOCK_ROWS = 16384   # 8 MiB per f32 input block upper cap


def _cdiv(a, b):
    return (a + b - 1) // b


def _round_up(a, b):
    return _cdiv(a, b) * b


@functools.lru_cache(maxsize=1)
def _chip_profile():
    """Generation-aware tiling / VMEM budgets (conservative when unknown)."""
    kind = ""
    try:
        kind = jax.devices()[0].device_kind.lower()
    except Exception:
        pass
    if "v7" in kind or "tpu7" in kind:
        # 2 TensorCores/chip, 64 MiB physical VMEM per core -> keep headroom.
        return dict(cores=2, is_v7=True, input_budget=28 << 20,
                    vmem_limit=48 << 20)
    if "v6" in kind:
        return dict(cores=1, is_v7=False, input_budget=24 << 20,
                    vmem_limit=96 << 20)
    if "v5" in kind and ("lite" in kind or "v5e" in kind):
        # v5e: 16 MiB default scoped VMEM, 128 MiB physical -> raise the limit.
        return dict(cores=1, is_v7=False, input_budget=16 << 20,
                    vmem_limit=64 << 20)
    # Unknown / older generations: stay small, keep the default scoped limit.
    return dict(cores=1, is_v7=False, input_budget=6 << 20, vmem_limit=None)


def _plan(rows, per_row_bytes, profile):
    """Pick (shards, block_rows, total_blocks, blocks_per_shard, tail, acc_sub)."""
    budget = profile["input_budget"]
    target = budget // (2 * per_row_bytes)               # 2 = double buffering
    target = max(MIN_ROWS, min(MAX_BLOCK_ROWS, (target // MIN_ROWS) * MIN_ROWS))

    shards = profile["cores"]
    if target >= rows:
        block_rows, total_blocks = rows, 1               # full-dim single block
    else:
        block_rows = target
        total_blocks = _cdiv(rows, block_rows)

    if shards > 1 and rows >= shards * MIN_ROWS:
        # Resize blocks so the count divides evenly across TensorCores:
        # no surplus / clamped duplicate block -> no wasted DMA.
        tb = _round_up(max(total_blocks, shards), shards)
        br = min(_round_up(_cdiv(rows, tb), MIN_ROWS), MAX_BLOCK_ROWS)
        tb = _cdiv(rows, br)
        if tb % shards == 0:
            block_rows, total_blocks = br, tb
        else:
            shards = 1                                   # tiny edge cases
    else:
        shards = 1

    blocks_per_shard = total_blocks // shards
    tail_mask = (rows % block_rows) != 0
    acc_sub = 8 if block_rows % 8 == 0 else 1            # vreg-shaped accumulator
    return shards, block_rows, total_blocks, blocks_per_shard, tail_mask, acc_sub


# ----------------------------------------------------------------------------
# Pallas kernels
# ----------------------------------------------------------------------------
def _masked_kernel(s_ref, t_ref, m_ref, sq_ref, msum_ref, acc_sq, acc_m, *,
                   rows, block_rows, total_blocks, blocks_per_shard,
                   tail_mask, acc_sub):
    i = pl.program_id(1)                          # block within shard (reduction)
    g = pl.program_id(0) * blocks_per_shard + i   # global block index

    @pl.when(i == 0)
    def _init():
        acc_sq[...] = jnp.zeros_like(acc_sq)
        acc_m[...] = jnp.zeros_like(acc_m)

    def _accumulate(is_tail):
        s = s_ref[...].astype(jnp.float32)
        t = t_ref[...].astype(jnp.float32)
        m = m_ref[...].astype(jnp.float32)
        # (s - t) * m == s*m - t*m exactly for 0/1 masks (last-ulp otherwise);
        # one multiply fewer per element than the literal PyTorch op order.
        diff = (s - t) * m
        if is_tail:
            # Rows past `rows` in the final (edge) block hold garbage from the
            # partial DMA; select-zero them (select, not multiply -> NaN-safe).
            valid = rows - (total_blocks - 1) * block_rows
            row_id = lax.broadcasted_iota(jnp.int32, (block_rows, LANE), 0)
            keep = row_id < valid
            diff = jnp.where(keep, diff, 0.0)
            m = jnp.where(keep, m, 0.0)
        acc_sq[...] += jnp.sum((diff * diff).reshape(-1, acc_sub, LANE), axis=0)
        acc_m[...] += jnp.sum(m.reshape(-1, acc_sub, LANE), axis=0)

    if tail_mask:
        # Only the global last block pays for the iota/compare/select tail fix.
        pl.when(g != total_blocks - 1)(lambda: _accumulate(False))
        pl.when(g == total_blocks - 1)(lambda: _accumulate(True))
    else:
        _accumulate(False)

    @pl.when(i == pl.num_programs(1) - 1)
    def _finalize():
        sq_ref[...] = acc_sq[...].reshape(1, acc_sub, LANE)
        msum_ref[...] = acc_m[...].reshape(1, acc_sub, LANE)


def _nomask_kernel(s_ref, t_ref, sq_ref, acc_sq, *,
                   rows, block_rows, total_blocks, blocks_per_shard,
                   tail_mask, acc_sub):
    i = pl.program_id(1)
    g = pl.program_id(0) * blocks_per_shard + i

    @pl.when(i == 0)
    def _init():
        acc_sq[...] = jnp.zeros_like(acc_sq)

    def _accumulate(is_tail):
        s = s_ref[...].astype(jnp.float32)
        t = t_ref[...].astype(jnp.float32)
        diff = s - t
        if is_tail:
            valid = rows - (total_blocks - 1) * block_rows
            row_id = lax.broadcasted_iota(jnp.int32, (block_rows, LANE), 0)
            diff = jnp.where(row_id < valid, diff, 0.0)
        acc_sq[...] += jnp.sum((diff * diff).reshape(-1, acc_sub, LANE), axis=0)

    if tail_mask:
        pl.when(g != total_blocks - 1)(lambda: _accumulate(False))
        pl.when(g == total_blocks - 1)(lambda: _accumulate(True))
    else:
        _accumulate(False)

    @pl.when(i == pl.num_programs(1) - 1)
    def _finalize():
        sq_ref[...] = acc_sq[...].reshape(1, acc_sub, LANE)


# ----------------------------------------------------------------------------
# pallas_call wrapper
# ----------------------------------------------------------------------------
def _pallas_partial_sums(inputs, masked):
    """inputs: list of (rows, 128) arrays (native dtypes).  Returns per-shard,
    per-sublane, per-lane f32 partial sums (summed to scalars by the caller)."""
    rows = inputs[0].shape[0]
    profile = _chip_profile()
    per_row_bytes = LANE * sum(x.dtype.itemsize for x in inputs)
    (shards, block_rows, total_blocks, blocks_per_shard,
     tail_mask, acc_sub) = _plan(rows, per_row_bytes, profile)

    in_specs = [pl.BlockSpec((block_rows, LANE),
                             lambda c, i: (c * blocks_per_shard + i, 0))
                for _ in inputs]
    out_spec = pl.BlockSpec((1, acc_sub, LANE), lambda c, i: (c, 0, 0))
    out_sd = jax.ShapeDtypeStruct((shards, acc_sub, LANE), jnp.float32)

    if shards > 1 and profile["is_v7"] and hasattr(pltpu, "CORE_PARALLEL"):
        sems = (pltpu.CORE_PARALLEL, pltpu.ARBITRARY)   # real 2-TC split on v7x
    elif shards > 1:
        sems = ("parallel", "arbitrary")
    else:
        sems = ("arbitrary", "arbitrary")

    cp_kwargs = dict(dimension_semantics=sems)
    if profile["vmem_limit"] is not None:
        cp_kwargs["vmem_limit_bytes"] = profile["vmem_limit"]

    kern_kwargs = dict(rows=rows, block_rows=block_rows,
                       total_blocks=total_blocks,
                       blocks_per_shard=blocks_per_shard,
                       tail_mask=tail_mask, acc_sub=acc_sub)

    if masked:
        kernel = functools.partial(_masked_kernel, **kern_kwargs)
        out_shape = (out_sd, out_sd)
        out_specs = [out_spec, out_spec]
        scratch = [pltpu.VMEM((acc_sub, LANE), jnp.float32),
                   pltpu.VMEM((acc_sub, LANE), jnp.float32)]
    else:
        kernel = functools.partial(_nomask_kernel, **kern_kwargs)
        out_shape = out_sd
        out_specs = out_spec
        scratch = [pltpu.VMEM((acc_sub, LANE), jnp.float32)]

    return pl.pallas_call(
        kernel,
        out_shape=out_shape,
        grid_spec=pltpu.PrefetchScalarGridSpec(
            num_scalar_prefetch=0,
            grid=(shards, blocks_per_shard),
            in_specs=in_specs,
            out_specs=out_specs,
            scratch_shapes=scratch),
        compiler_params=pltpu.CompilerParams(**cp_kwargs),
    )(*inputs)


# ----------------------------------------------------------------------------
# Host-side reductions (Pallas main body + tiny plain-JAX epilogues)
# ----------------------------------------------------------------------------
def _jax_masked_sums(s, t, m):
    s = s.astype(jnp.float32)
    t = t.astype(jnp.float32)
    m = m.astype(jnp.float32)
    d = (s - t) * m
    return jnp.sum(d * d), jnp.sum(m)


def _jax_sq_sum(s, t):
    d = s.astype(jnp.float32) - t.astype(jnp.float32)
    return jnp.sum(d * d)


def _aligned_2d(flat, rows, n_aligned):
    if flat.shape[0] != n_aligned:
        flat = flat[:n_aligned]        # 128-aligned prefix only (no full pad)
    return flat.reshape(rows, LANE)


def _masked_sums(student, teacher, mask):
    s, t, m = student.reshape(-1), teacher.reshape(-1), mask.reshape(-1)
    n = s.shape[0]
    rows = n // LANE
    n_aligned = rows * LANE
    sq = jnp.float32(0.0)
    msum = jnp.float32(0.0)
    if n_aligned < n:
        # <128-element lane remainder: negligible plain-JAX epilogue.
        rs, rm = _jax_masked_sums(s[n_aligned:], t[n_aligned:], m[n_aligned:])
        sq += rs
        msum += rm
    if rows >= 8:
        sq_p, m_p = _pallas_partial_sums(
            [_aligned_2d(s, rows, n_aligned),
             _aligned_2d(t, rows, n_aligned),
             _aligned_2d(m, rows, n_aligned)], masked=True)
        sq += jnp.sum(sq_p)
        msum += jnp.sum(m_p)
    elif rows > 0:
        rs, rm = _jax_masked_sums(s[:n_aligned], t[:n_aligned], m[:n_aligned])
        sq += rs
        msum += rm
    return sq, msum


def _sq_sum(student, teacher):
    s, t = student.reshape(-1), teacher.reshape(-1)
    n = s.shape[0]
    rows = n // LANE
    n_aligned = rows * LANE
    sq = jnp.float32(0.0)
    if n_aligned < n:
        sq += _jax_sq_sum(s[n_aligned:], t[n_aligned:])
    if rows >= 8:
        sq_p = _pallas_partial_sums(
            [_aligned_2d(s, rows, n_aligned),
             _aligned_2d(t, rows, n_aligned)], masked=False)
        sq += jnp.sum(sq_p)
    elif rows > 0:
        sq += _jax_sq_sum(s[:n_aligned], t[:n_aligned])
    return sq


# ----------------------------------------------------------------------------
# Plain-JAX glue: align_corners=True bilinear resize (PyTorch F.interpolate).
# TODO(synk): bilinear align_corners resize is plain-JAX gather+lerp glue, not
# a Pallas kernel (it is not the hot path of this loss).
# ----------------------------------------------------------------------------
def _bilinear_resize_align_corners(x, out_h, out_w):
    """x: (N, C, H, W) -> (N, C, out_h, out_w), align_corners=True semantics."""
    _, _, h, w = x.shape
    if h == out_h and w == out_w:
        return x

    def src_coords(out_size, in_size):
        if out_size == 1:
            return jnp.zeros((out_size,), jnp.float32)
        scale = (in_size - 1) / (out_size - 1)
        return jnp.arange(out_size, dtype=jnp.float32) * scale

    ys = src_coords(out_h, h)
    xs = src_coords(out_w, w)
    y0 = jnp.floor(ys).astype(jnp.int32)
    y1 = jnp.minimum(y0 + 1, h - 1)
    x0 = jnp.floor(xs).astype(jnp.int32)
    x1 = jnp.minimum(x0 + 1, w - 1)
    wy = (ys - y0.astype(jnp.float32))[None, None, :, None]
    wx = (xs - x0.astype(jnp.float32))[None, None, None, :]

    xf = x.astype(jnp.float32)
    top = xf[:, :, y0, :]
    bot = xf[:, :, y1, :]
    v = top * (1.0 - wy) + bot * wy
    left = v[:, :, :, x0]
    right = v[:, :, :, x1]
    return left * (1.0 - wx) + right * wx


# ----------------------------------------------------------------------------
# Module-equivalent wrapper.
# ----------------------------------------------------------------------------
def distillation_loss(student_output, teacher_output, target=None, mask=None,
                      alpha=0.5, temperature=3.0):
    # alpha / temperature are stored by __init__ but unused in forward.
    del target, alpha, temperature
    if teacher_output.shape != student_output.shape:
        teacher_output = _bilinear_resize_align_corners(
            teacher_output,
            student_output.shape[2],
            student_output.shape[3],
        )
    if mask is None:
        # mask == ones: never stream a ones tensor; sum(mask) == numel.
        sq = _sq_sum(student_output, teacher_output)
        return sq / jnp.float32(student_output.size)
    if mask.dtype == jnp.bool_:
        mask = mask.astype(jnp.int8)   # narrow streaming dtype; kernel upcasts
    # NOTE: if mask.sum() == 0 the loss is NaN/Inf, matching PyTorch semantics.
    sq, msum = _masked_sums(student_output, teacher_output, mask)
    return sq / msum


if __name__ == "__main__":
    key = jax.random.PRNGKey(0)
    ks = jax.random.split(key, 11)

    # --- Test 1: resize path + f32 mask, small NCHW --------------------------
    student = jax.random.normal(ks[0], (2, 4, 16, 16), dtype=jnp.float32)
    teacher = jax.random.normal(ks[1], (2, 4, 8, 8), dtype=jnp.float32)
    mask = (jax.random.uniform(ks[2], (2, 4, 16, 16)) > 0.3).astype(jnp.float32)
    loss = jax.block_until_ready(distillation_loss(student, teacher, mask=mask))
    teacher_up = _bilinear_resize_align_corners(teacher, 16, 16)
    ref = jnp.sum((student * mask - teacher_up * mask) ** 2) / jnp.sum(mask)
    assert jnp.allclose(loss, ref, rtol=1e-5, atol=1e-6), (loss, ref)

    # --- Test 2: mask=None fast path (no ones tensor streamed) ---------------
    loss_nm = jax.block_until_ready(distillation_loss(student, teacher_up))
    ref_nm = jnp.mean((student - teacher_up) ** 2)
    assert jnp.allclose(loss_nm, ref_nm, rtol=1e-5, atol=1e-6), (loss_nm, ref_nm)

    # --- Test 3: lane-ragged numel -> aligned prefix + plain-JAX remainder ---
    s3 = jax.random.normal(ks[3], (1, 3, 19, 19), dtype=jnp.float32)
    t3 = jax.random.normal(ks[4], (1, 3, 19, 19), dtype=jnp.float32)
    m3 = (jax.random.uniform(ks[5], (1, 3, 19, 19)) > 0.5).astype(jnp.float32)
    loss3 = jax.block_until_ready(distillation_loss(s3, t3, mask=m3))
    ref3 = jnp.sum((s3 * m3 - t3 * m3) ** 2) / jnp.sum(m3)
    assert jnp.allclose(loss3, ref3, rtol=1e-5, atol=1e-6), (loss3, ref3)

    # --- Test 4: multi-block grid, tail-masked edge block, int8 mask stream --
    s4 = jax.random.normal(ks[6], (2, 3, 2000, 128), dtype=jnp.float32)
    t4 = s4 + 0.1 * jax.random.normal(ks[7], (2, 3, 2000, 128), dtype=jnp.float32)
    m4 = (jax.random.uniform(ks[8], (2, 3, 2000, 128)) > 0.5).astype(jnp.int8)
    loss4 = jax.block_until_ready(distillation_loss(s4, t4, mask=m4))
    m4f = m4.astype(jnp.float32)
    ref4 = jnp.sum((s4 * m4f - t4 * m4f) ** 2) / jnp.sum(m4f)
    assert jnp.allclose(loss4, ref4, rtol=1e-4, atol=1e-6), (loss4, ref4)

    # --- Test 5: bf16 inputs streamed natively, mask=None ---------------------
    s5 = jax.random.normal(ks[9], (2, 4, 64, 64), dtype=jnp.bfloat16)
    t5 = jax.random.normal(ks[10], (2, 4, 64, 64), dtype=jnp.bfloat16)
    loss5 = jax.block_until_ready(distillation_loss(s5, t5))
    ref5 = jnp.mean((s5.astype(jnp.float32) - t5.astype(jnp.float32)) ** 2)
    assert jnp.allclose(loss5, ref5, rtol=1e-5, atol=1e-6), (loss5, ref5)

    print("KERNEL_OK")
</pallas_src>

<mosaic_0001>
module attributes {stable_mosaic.version = 11 : i64} {
  func.func @_masked_kernel(%arg0: i32, %arg1: i32, %arg2: memref<16x128xf32, #tpu.memory_space<vmem>>, %arg3: memref<16x128xf32, #tpu.memory_space<vmem>>, %arg4: memref<16x128xf32, #tpu.memory_space<vmem>>, %arg5: memref<1x8x128xf32, #tpu.memory_space<vmem>>, %arg6: memref<1x8x128xf32, #tpu.memory_space<vmem>>, %arg7: memref<8x128xf32, #tpu.memory_space<vmem>>, %arg8: memref<8x128xf32, #tpu.memory_space<vmem>>) attributes {dimension_semantics = [#tpu.dimension_semantics<arbitrary>, #tpu.dimension_semantics<arbitrary>], iteration_bounds = array<i64: 1, 1>, scalar_prefetch = 0 : i64, scratch_operands = 2 : i64, tpu.core_type = #tpu.core_type<tc>, window_params = [{transform_indices = @transform_0, window_bounds = array<i64: 16, 128>}, {transform_indices = @transform_1, window_bounds = array<i64: 16, 128>}, {transform_indices = @transform_2, window_bounds = array<i64: 16, 128>}, {transform_indices = @transform_3, window_bounds = array<i64: 1, 8, 128>}, {transform_indices = @transform_4, window_bounds = array<i64: 1, 8, 128>}]} {
    %c0_i32 = arith.constant 0 : i32
    %0 = arith.cmpi eq, %arg1, %c0_i32 : i32
    %1 = arith.extui %0 : i1 to i32
    %c0_i32_0 = arith.constant 0 : i32
    %2 = arith.cmpi ne, %1, %c0_i32_0 : i32
    scf.if %2 {
      %cst_17 = arith.constant 0.000000e+00 : f32
      %22 = vector.broadcast %cst_17 : f32 to vector<8x128xf32>
      %c0_18 = arith.constant 0 : index
      %c0_19 = arith.constant 0 : index
      %23 = vector.load %arg7[%c0_18, %c0_19] : memref<8x128xf32, #tpu.memory_space<vmem>>, vector<8x128xf32>
      tpu.vector_store %arg7[%c0_18, %c0_19], %22 {strides = array<i32>} : memref<8x128xf32, #tpu.memory_space<vmem>>, vector<8x128xf32>,
      %cst_20 = arith.constant 0.000000e+00 : f32
      %24 = vector.broadcast %cst_20 : f32 to vector<8x128xf32>
      %c0_21 = arith.constant 0 : index
      %c0_22 = arith.constant 0 : index
      %25 = vector.load %arg8[%c0_21, %c0_22] : memref<8x128xf32, #tpu.memory_space<vmem>>, vector<8x128xf32>
      tpu.vector_store %arg8[%c0_21, %c0_22], %24 {strides = array<i32>} : memref<8x128xf32, #tpu.memory_space<vmem>>, vector<8x128xf32>,
    } else {
    }
    %c0 = arith.constant 0 : index
    %c0_1 = arith.constant 0 : index
    %3 = vector.load %arg2[%c0, %c0_1] : memref<16x128xf32, #tpu.memory_space<vmem>>, vector<16x128xf32>
    %c0_2 = arith.constant 0 : index
    %c0_3 = arith.constant 0 : index
    %4 = vector.load %arg3[%c0_2, %c0_3] : memref<16x128xf32, #tpu.memory_space<vmem>>, vector<16x128xf32>
    %c0_4 = arith.constant 0 : index
    %c0_5 = arith.constant 0 : index
    %5 = vector.load %arg4[%c0_4, %c0_5] : memref<16x128xf32, #tpu.memory_space<vmem>>, vector<16x128xf32>
    %6 = arith.subf %3, %4 : vector<16x128xf32>
    %7 = arith.mulf %6, %5 : vector<16x128xf32>
    %c0_6 = arith.constant 0 : index
    %c0_7 = arith.constant 0 : index
    %8 = vector.load %arg7[%c0_6, %c0_7] : memref<8x128xf32, #tpu.memory_space<vmem>>, vector<8x128xf32>
    %9 = arith.mulf %7, %7 : vector<16x128xf32>
    %10 = vector.shape_cast %9 : vector<16x128xf32> to vector<2x8x128xf32>
    %cst = arith.constant dense<0.000000e+00> : vector<8x128xf32>
    %11 = vector.multi_reduction <add>, %10, %cst [0] : vector<2x8x128xf32> to vector<8x128xf32>
    %12 = arith.addf %8, %11 : vector<8x128xf32>
    %c0_8 = arith.constant 0 : index
    %c0_9 = arith.constant 0 : index
    %13 = vector.load %arg7[%c0_8, %c0_9] : memref<8x128xf32, #tpu.memory_space<vmem>>, vector<8x128xf32>
    tpu.vector_store %arg7[%c0_8, %c0_9], %12 {strides = array<i32>} : memref<8x128xf32, #tpu.memory_space<vmem>>, vector<8x128xf32>,
    %c0_10 = arith.constant 0 : index
    %c0_11 = arith.constant 0 : index
    %14 = vector.load %arg8[%c0_10, %c0_11] : memref<8x128xf32, #tpu.memory_space<vmem>>, vector<8x128xf32>
    %15 = vector.shape_cast %5 : vector<16x128xf32> to vector<2x8x128xf32>
    %cst_12 = arith.constant dense<0.000000e+00> : vector<8x128xf32>
    %16 = vector.multi_reduction <add>, %15, %cst_12 [0] : vector<2x8x128xf32> to vector<8x128xf32>
    %17 = arith.addf %14, %16 : vector<8x128xf32>
    %c0_13 = arith.constant 0 : index
    %c0_14 = arith.constant 0 : index
    %18 = vector.load %arg8[%c0_13, %c0_14] : memref<8x128xf32, #tpu.memory_space<vmem>>, vector<8x128xf32>
    tpu.vector_store %arg8[%c0_13, %c0_14], %17 {strides = array<i32>} : memref<8x128xf32, #tpu.memory_space<vmem>>, vector<8x128xf32>,
    %c0_i32_15 = arith.constant 0 : i32
    %19 = arith.cmpi eq, %arg1, %c0_i32_15 : i32
    %20 = arith.extui %19 : i1 to i32
    %c0_i32_16 = arith.constant 0 : i32
    %21 = arith.cmpi ne, %20, %c0_i32_16 : i32
    scf.if %21 {
      %c0_17 = arith.constant 0 : index
      %c0_18 = arith.constant 0 : index
      %22 = vector.load %arg7[%c0_17, %c0_18] : memref<8x128xf32, #tpu.memory_space<vmem>>, vector<8x128xf32>
      %23 = vector.shape_cast %22 : vector<8x128xf32> to vector<1x8x128xf32>
      %c0_19 = arith.constant 0 : index
      %c0_20 = arith.constant 0 : index
      %c0_21 = arith.constant 0 : index
      %24 = vector.load %arg5[%c0_19, %c0_20, %c0_21] : memref<1x8x128xf32, #tpu.memory_space<vmem>>, vector<1x8x128xf32>
      tpu.vector_store %arg5[%c0_19, %c0_20, %c0_21], %23 {strides = array<i32>} : memref<1x8x128xf32, #tpu.memory_space<vmem>>, vector<1x8x128xf32>,
      %c0_22 = arith.constant 0 : index
      %c0_23 = arith.constant 0 : index
      %25 = vector.load %arg8[%c0_22, %c0_23] : memref<8x128xf32, #tpu.memory_space<vmem>>, vector<8x128xf32>
      %26 = vector.shape_cast %25 : vector<8x128xf32> to vector<1x8x128xf32>
      %c0_24 = arith.constant 0 : index
      %c0_25 = arith.constant 0 : index
      %c0_26 = arith.constant 0 : index
      %27 = vector.load %arg6[%c0_24, %c0_25, %c0_26] : memref<1x8x128xf32, #tpu.memory_space<vmem>>, vector<1x8x128xf32>
      tpu.vector_store %arg6[%c0_24, %c0_25, %c0_26], %26 {strides = array<i32>} : memref<1x8x128xf32, #tpu.memory_space<vmem>>, vector<1x8x128xf32>,
    } else {
    }
    return
  }
  func.func @transform_0(%arg0: i32, %arg1: i32) -> (i32, i32) {
    %c1_i32 = arith.constant 1 : i32
    %0 = arith.muli %arg0, %c1_i32 : i32
    %1 = arith.addi %0, %arg1 : i32
    %c0_i32 = arith.constant 0 : i32
    %c0_i32_0 = arith.constant 0 : i32
    return %1, %c0_i32 : i32, i32
  }
  func.func @transform_1(%arg0: i32, %arg1: i32) -> (i32, i32) {
    %c1_i32 = arith.constant 1 : i32
    %0 = arith.muli %arg0, %c1_i32 : i32
    %1 = arith.addi %0, %arg1 : i32
    %c0_i32 = arith.constant 0 : i32
    %c0_i32_0 = arith.constant 0 : i32
    return %1, %c0_i32 : i32, i32
  }
  func.func @transform_2(%arg0: i32, %arg1: i32) -> (i32, i32) {
    %c1_i32 = arith.constant 1 : i32
    %0 = arith.muli %arg0, %c1_i32 : i32
    %1 = arith.addi %0, %arg1 : i32
    %c0_i32 = arith.constant 0 : i32
    %c0_i32_0 = arith.constant 0 : i32
    return %1, %c0_i32 : i32, i32
  }
  func.func @transform_3(%arg0: i32, %arg1: i32) -> (i32, i32, i32) {
    %c0_i32 = arith.constant 0 : i32
    %c0_i32_0 = arith.constant 0 : i32
    %c0_i32_1 = arith.constant 0 : i32
    return %arg0, %c0_i32, %c0_i32_0 : i32, i32, i32
  }
  func.func @transform_4(%arg0: i32, %arg1: i32) -> (i32, i32, i32) {
    %c0_i32 = arith.constant 0 : i32
    %c0_i32_0 = arith.constant 0 : i32
    %c0_i32_1 = arith.constant 0 : i32
    return %arg0, %c0_i32, %c0_i32_0 : i32, i32, i32
  }
}

</mosaic_0001>

<llo_original>
// kernel: tpu_custom_call.1
$region0: #{tpu_custom_call.1}
  #allocation0 [shape = 'u32[]', space=smem, size = 0x4, offset = 0x4, fixed_abs, tag = 'smem constant byte address 0x4 - core index']
  #allocation1 [shape = 'u32[144,128]{1,0:T(1,128)}', space=vmem, size = 0x12000, scoped, tag = 'internal scratch']
  #allocation2 [shape = 'f32[8,128]{1,0:T(8,128)}', space=vmem, size = 0x1000, scoped, tag = 'scratch operand']
  #allocation3 [shape = 'f32[8,128]{1,0:T(8,128)}', space=vmem, size = 0x1000, scoped, tag = 'scratch operand']
  %s0 = inlined_call_operand.hbm [shape: f32[16,128], index: 0, kind: input, shape index: {}]
  %s1 = inlined_call_operand.hbm [shape: f32[16,128], index: 1, kind: input, shape index: {}]
  %s2 = inlined_call_operand.hbm [shape: f32[16,128], index: 2, kind: input, shape index: {}]
  %s3 = inlined_call_operand.hbm [shape: f32[1,8,128], index: 3, kind: output, shape index: {0}]
  %s4 = inlined_call_operand.hbm [shape: f32[1,8,128], index: 4, kind: output, shape index: {1}]
  %5 = xla_tuple %s3, %s4
  %s6 = sld [smem:[#allocation0]]
  $region50: #{tpu_custom_call.1} parent=0
    _
  %s8 = ssub.s32 1, %s6
  %s9 = scalar_select 0, %s8, %s6
  $region1: #{tpu_custom_call.1} parent=0
    #allocation4 [shape = 'u8[8192]{0}', space=vmem, size = 0x2000, scoped, tag = 'input window, operand 0, single buffered']
    #allocation5 [shape = 's32[1]{0}', space=sflag, size = 0x4, scoped, tag = 'scoped memory for tpu_custom_call.1']
    #allocation6 [shape = 's32[1]{0}', space=sflag, size = 0x4, scoped, tag = 'scoped memory for tpu_custom_call.1']
    #allocation7 [shape = 'u8[8192]{0}', space=vmem, size = 0x2000, scoped, tag = 'input window, operand 1, single buffered']
    #allocation8 [shape = 's32[1]{0}', space=sflag, size = 0x4, scoped, tag = 'scoped memory for tpu_custom_call.1']
    #allocation9 [shape = 'u8[8192]{0}', space=vmem, size = 0x2000, scoped, tag = 'input window, operand 2, single buffered']
    #allocation10 [shape = 'u8[4096]{0}', space=vmem, size = 0x1000, scoped, tag = 'output window, operand 0, single buffered']
    #allocation11 [shape = 'u8[4096]{0}', space=vmem, size = 0x1000, scoped, tag = 'output window, operand 1, single buffered']
    #allocation12 [shape = 's32[1]{0}', space=sflag, size = 0x4, scoped, tag = 'scoped memory for tpu_custom_call.1']
    %10 = vsyncpa [#allocation5], 0
    %11 = vsyncpa [#allocation8], 0
    %12 = vsyncpa [#allocation6], 0
    %13 = vsyncpa [#allocation12], 0
    // Predicated region
    $region2: #{tpu_custom_call.1} parent=1 // pred_check
      _
    $region3: #{tpu_custom_call.1} parent=1 // pred_check_branch
      %15 = sbr.rel (0) target = $region5
    $region4: #{tpu_custom_call.1} parent=1 // pred_region
      %s16 = sadd.s32 0, 0
      %s17 = smul.u32 2, %s16
      %s19 = ssub.s32 256, 256
      %20 = vsyncadd [#allocation5], %s19
      %s21 = smul.addr %s17, 128
      %s22 = scalar_lea.hbm %s0, %s21
      %s23 = sshll.u32 [#allocation4], 4
      %s24 = int_to_ptr.vmem [resolvable:$true] %s23
      %29 = dma.hbm_to_vmem [thread:$0]  %s22, 256, %s24, [#allocation5], 128, 128, 8
    $region5: #{tpu_custom_call.1} parent=1 // pred_fallthru
      _
    // Predicated region
    $region6: #{tpu_custom_call.1} parent=1 // pred_check
      _
    $region7: #{tpu_custom_call.1} parent=1 // pred_check_branch
      %31 = sbr.rel (0) target = $region9
    $region8: #{tpu_custom_call.1} parent=1 // pred_region
      %s32 = sadd.s32 0, 0
      %s33 = smul.u32 2, %s32
      %s35 = ssub.s32 256, 256
      %36 = vsyncadd [#allocation8], %s35
      %s37 = smul.addr %s33, 128
      %s38 = scalar_lea.hbm %s1, %s37
      %s39 = sshll.u32 [#allocation7], 4
      %s40 = int_to_ptr.vmem [resolvable:$true] %s39
      %45 = dma.hbm_to_vmem [thread:$0]  %s38, 256, %s40, [#allocation8], 128, 128, 8
    $region9: #{tpu_custom_call.1} parent=1 // pred_fallthru
      _
    // Predicated region
    $region10: #{tpu_custom_call.1} parent=1 // pred_check
      _
    $region11: #{tpu_custom_call.1} parent=1 // pred_check_branch
      %47 = sbr.rel (0) target = $region13
    $region12: #{tpu_custom_call.1} parent=1 // pred_region
      %s48 = sadd.s32 0, 0
      %s49 = smul.u32 2, %s48
      %s51 = ssub.s32 256, 256
      %52 = vsyncadd [#allocation8], %s51
      %s53 = smul.addr %s49, 128
      %s54 = scalar_lea.hbm %s2, %s53
      %s55 = sshll.u32 [#allocation9], 4
      %s56 = int_to_ptr.vmem [resolvable:$true] %s55
      %61 = dma.hbm_to_vmem [thread:$0]  %s54, 256, %s56, [#allocation8], 128, 128, 8
    $region13: #{tpu_custom_call.1} parent=1 // pred_fallthru
      _
    // Predicated region
    $region14: #{tpu_custom_call.1} parent=1 // pred_check
      _
    $region15: #{tpu_custom_call.1} parent=1 // pred_check_branch
      %63 = sbr.rel (0) target = $region17
    $region16: #{tpu_custom_call.1} parent=1 // pred_region
      %64 = dma.done [#allocation5], 256
    $region17: #{tpu_custom_call.1} parent=1 // pred_fallthru
      _
    // Predicated region
    $region18: #{tpu_custom_call.1} parent=1 // pred_check
      _
    $region19: #{tpu_custom_call.1} parent=1 // pred_check_branch
      %66 = sbr.rel (0) target = $region21
    $region20: #{tpu_custom_call.1} parent=1 // pred_region
      %67 = dma.done [#allocation8], 256
    $region21: #{tpu_custom_call.1} parent=1 // pred_fallthru
      _
    // Predicated region
    $region22: #{tpu_custom_call.1} parent=1 // pred_check
      _
    $region23: #{tpu_custom_call.1} parent=1 // pred_check_branch
      %69 = sbr.rel (0) target = $region25
    $region24: #{tpu_custom_call.1} parent=1 // pred_region
      %70 = dma.done [#allocation8], 256
    $region25: #{tpu_custom_call.1} parent=1 // pred_fallthru
      _
    %s71 = sadd.s32 0, 0
    %s72 = smul.u32 2, %s71
    %s73 = sadd.s32 0, 0
    %s74 = smul.u32 2, %s73
    %s75 = sadd.s32 0, 0
    %s76 = smul.u32 2, %s75
    %p77 = scmp.eq.s32.totalorder 0, 0
    // Predicated region
    $region26: #{tpu_custom_call.1} parent=1 // pred_check
      %p78 = pneg %p77
    $region27: #{tpu_custom_call.1} parent=1 // pred_check_branch
      %80 = sbr.rel (%p78) target = $region29
    $region28: #{tpu_custom_call.1} parent=1 // pred_region
      %81 = vst [vmem:[#allocation2] sm:$0xff] 0.0
      %82 = vst [vmem:[#allocation3] sm:$0xff] 0.0
    $region29: #{tpu_custom_call.1} parent=1 // pred_fallthru
      _
    %v83 = vld [vmem:[#allocation4] sm:$0xff]
    %v84 = vld [vmem:[#allocation4 + $0x8] sm:$0xff]
    %v85 = vld [vmem:[#allocation7] sm:$0xff]
    %v86 = vld [vmem:[#allocation7 + $0x8] sm:$0xff]
    %v87 = vld [vmem:[#allocation9] sm:$0xff]
    %v88 = vld [vmem:[#allocation9 + $0x8] sm:$0xff]
    %v89 = vsub.f32 %v83, %v85
    %v90 = vsub.f32 %v84, %v86
    %v91 = vmul.f32 %v89, %v87
    %v92 = vmul.f32 %v90, %v88
    %v93 = vld [vmem:[#allocation2] sm:$0xff]
    %v94 = vmul.f32 %v91, %v91
    %v95 = vmul.f32 %v92, %v92
    %v96 = vadd.f32 %v94, %v95
    %v97 = vadd.f32 %v93, %v96
    %98 = vst [vmem:[#allocation2] sm:$0xff] %v97
    %v99 = vld [vmem:[#allocation3] sm:$0xff]
    %v100 = vadd.f32 %v87, %v88
    %v101 = vadd.f32 %v99, %v100
    %102 = vst [vmem:[#allocation3] sm:$0xff] %v101
    // Predicated region
    $region30: #{tpu_custom_call.1} parent=1 // pred_check
      %p103 = pneg %p77
    $region31: #{tpu_custom_call.1} parent=1 // pred_check_branch
      %105 = sbr.rel (%p103) target = $region33
    $region32: #{tpu_custom_call.1} parent=1 // pred_region
      %v106 = vld [vmem:[#allocation2] sm:$0xff]
      %107 = vst [vmem:[#allocation10] sm:$0xff] %v106
      %v108 = vld [vmem:[#allocation3] sm:$0xff]
      %109 = vst [vmem:[#allocation11] sm:$0xff] %v108
    $region33: #{tpu_custom_call.1} parent=1 // pred_fallthru
      _
    // Predicated region
    $region34: #{tpu_custom_call.1} parent=1 // pred_check
      _
    $region35: #{tpu_custom_call.1} parent=1 // pred_check_branch
      %111 = sbr.rel (0) target = $region37
    $region36: #{tpu_custom_call.1} parent=1 // pred_region
      %s113 = ssub.s32 128, 128
      %114 = vsyncadd [#allocation6], %s113
      %s116 = sshll.u32 [#allocation10], 4
      %s117 = int_to_ptr.vmem [resolvable:$true] %s116
      %119 = dma.vmem_to_hbm [thread:$0]  %s117, 128, %s3, [#allocation6]
    $region37: #{tpu_custom_call.1} parent=1 // pred_fallthru
      _
    // Predicated region
    $region38: #{tpu_custom_call.1} parent=1 // pred_check
      _
    $region39: #{tpu_custom_call.1} parent=1 // pred_check_branch
      %121 = sbr.rel (0) target = $region41
    $region40: #{tpu_custom_call.1} parent=1 // pred_region
      %s123 = ssub.s32 128, 128
      %124 = vsyncadd [#allocation12], %s123
      %s126 = sshll.u32 [#allocation11], 4
      %s127 = int_to_ptr.vmem [resolvable:$true] %s126
      %129 = dma.vmem_to_hbm [thread:$0]  %s127, 128, %s4, [#allocation12]
    $region41: #{tpu_custom_call.1} parent=1 // pred_fallthru
      _
    // Predicated region
    $region42: #{tpu_custom_call.1} parent=1 // pred_check
      _
    $region43: #{tpu_custom_call.1} parent=1 // pred_check_branch
      %131 = sbr.rel (0) target = $region45
    $region44: #{tpu_custom_call.1} parent=1 // pred_region
      %132 = dma.done [#allocation6], 128
    $region45: #{tpu_custom_call.1} parent=1 // pred_fallthru
      _
    // Predicated region
    $region46: #{tpu_custom_call.1} parent=1 // pred_check
      _
    $region47: #{tpu_custom_call.1} parent=1 // pred_check_branch
      %134 = sbr.rel (0) target = $region49
    $region48: #{tpu_custom_call.1} parent=1 // pred_region
      %135 = dma.done [#allocation12], 128
    $region49: #{tpu_custom_call.1} parent=1 // pred_fallthru
      _
    %136 = vsyncpa [#allocation5], 1
    %137 = vsyncpa [#allocation8], 1
    %138 = vsyncpa [#allocation6], 1
    %139 = vsyncpa [#allocation12], 1

</llo_original>
